<compile_context>
chip_gen: v6e
topology: v6e:2x2x1
jax: 0.10.0
libtpu: 0.0.40
codegen_flags: <defaults>
</compile_context>

<pallas_src>
import functools

import jax
import jax.numpy as jnp
from jax.experimental import pallas as pl
from jax.experimental.pallas import tpu as pltpu


def _round_up(x, m):
    return ((x + m - 1) // m) * m


def _vmem_capacity_bytes():
    try:
        return int(pltpu.get_tpu_info().vmem_capacity_bytes)
    except Exception:
        return 64 * 1024 * 1024  # conservative fallback (v7x per-TC physical)


def _choose_batch_tile(B, row_bytes, itemsize, *,
                       target_tile_bytes=2 * 1024 * 1024,
                       min_split_bytes=256 * 1024):
    """Pick (tile_rows, padded_batch).

    tile_rows is a multiple of the dtype-native sublane pack (8 f32 / 16 bf16 /
    32 int8), sized so one input tile is ~target_tile_bytes, and capped so the
    grid has >= 2 steps whenever there is enough data for the second v7x
    TensorCore to matter.
    """
    sub = max(8, 32 // max(1, itemsize))
    b_sub = _round_up(B, sub)
    tb = max(sub, (target_tile_bytes // max(1, row_bytes)) // sub * sub)
    tb = min(tb, b_sub)
    if b_sub * row_bytes >= min_split_bytes:  # give both v7x TCs work
        tb = min(tb, max(sub, _round_up(pl.cdiv(B, 2), sub)))
    b_pad = _round_up(B, tb)
    return int(tb), int(b_pad)


def _fm_kernel_matmul(x_ref, s_ref, o_ref, *, reduce_sum):
    # x_ref: (TB, F*D) lane-dense tile; s_ref: (F*D, D) 0/1 selection matrix.
    xf = x_ref[...].astype(jnp.float32)
    # Field-sum on the (otherwise idle) MXU: (TB, F*D) @ (F*D, D) -> (TB, D).
    fsum = jnp.dot(xf, s_ref[...], preferred_element_type=jnp.float32)
    if reduce_sum:
        ix = jnp.sum(fsum * fsum, axis=-1) - jnp.sum(xf * xf, axis=-1)  # (TB,)
        o_ref[...] = (0.5 * ix)[None, :].astype(o_ref.dtype)            # (1, TB)
    else:
        sqsum = jnp.dot(xf * xf, s_ref[...], preferred_element_type=jnp.float32)
        o_ref[...] = (0.5 * (fsum * fsum - sqsum)).astype(o_ref.dtype)  # (TB, D)


def _fm_kernel_reshape(x_ref, o_ref, *, num_fields, embed_dim, reduce_sum):
    # D % 128 == 0: the split of the last dim is lane-aligned (free view).
    xf = x_ref[...].astype(jnp.float32).reshape(-1, num_fields, embed_dim)
    s = jnp.sum(xf, axis=1)                 # (TB, D)
    sq = jnp.sum(xf * xf, axis=1)           # (TB, D)
    ix = s * s - sq
    if reduce_sum:
        o_ref[...] = (0.5 * jnp.sum(ix, axis=-1))[None, :].astype(o_ref.dtype)
    else:
        o_ref[...] = (0.5 * ix).astype(o_ref.dtype)


def factorization_machine(x, reduce_sum=True):
    """Pallas TPU forward of FactorizationMachine.

    x: (batch, num_fields, embed_dim) float array.
    Returns (batch, 1) if reduce_sum else (batch, embed_dim).
    """
    B, F, D = x.shape
    FD = F * D
    itemsize = jnp.dtype(x.dtype).itemsize

    x_flat = x.reshape(B, FD)                          # free layout-preserving reshape
    lane_row_bytes = _round_up(FD, 128) * itemsize     # VMEM bytes of one batch row
    tb, b_pad = _choose_batch_tile(B, lane_row_bytes, itemsize)
    if b_pad != B:
        # Zero rows contribute exactly 0 to the FM interaction; sliced off below.
        x_flat = jnp.pad(x_flat, ((0, b_pad - B), (0, 0)))
    num_tiles = b_pad // tb

    use_matmul = (D % 128 != 0)
    in_specs = [pl.BlockSpec((tb, FD), lambda i: (i, 0))]
    operands = [x_flat]
    if use_matmul:
        # Constant 0/1 selection matrix: S[f*D + d, d] = 1  ->  field sum on MXU.
        sel = (jnp.arange(FD, dtype=jnp.int32)[:, None] % D
               == jnp.arange(D, dtype=jnp.int32)[None, :]).astype(jnp.float32)
        in_specs.append(pl.BlockSpec((FD, D), lambda i: (0, 0)))  # resident in VMEM
        operands.append(sel)
        kernel = functools.partial(_fm_kernel_matmul, reduce_sum=reduce_sum)
    else:
        kernel = functools.partial(_fm_kernel_reshape, num_fields=F,
                                   embed_dim=D, reduce_sum=reduce_sum)

    if reduce_sum:
        # Lane-dense output: one (1, TB) row block per grid step.
        out_shape = jax.ShapeDtypeStruct((num_tiles, tb), x.dtype)
        out_specs = pl.BlockSpec((1, tb), lambda i: (i, 0))
        out_tile_bytes = _round_up(tb, 128) * itemsize
        out_bytes = b_pad * itemsize
    else:
        out_shape = jax.ShapeDtypeStruct((b_pad, D), x.dtype)
        out_specs = pl.BlockSpec((tb, D), lambda i: (i, 0))
        out_tile_bytes = tb * _round_up(D, 128) * itemsize
        out_bytes = b_pad * D * itemsize

    # Generation-aware VMEM budget: double-buffered input + output, resident
    # selection matrix, plus the in-kernel f32 intermediates.
    in_tile_bytes = tb * _round_up(FD, 128) * itemsize
    f32_tile_bytes = tb * _round_up(FD, 128) * 4
    sel_bytes = (_round_up(FD, 8) * _round_up(D, 128) * 4) if use_matmul else 0
    vmem_est = (2 * in_tile_bytes + 2 * out_tile_bytes + 2 * sel_bytes
                + 4 * f32_tile_bytes)
    cap = _vmem_capacity_bytes()
    vmem_limit = int(min(max(32 * 1024 * 1024, vmem_est * 3 // 2),
                         max(32 * 1024 * 1024, cap // 2)))

    flops_per_row = (2 * FD * D + 4 * FD + 4 * D) if use_matmul else 5 * FD
    cost = pl.CostEstimate(
        flops=int(b_pad * flops_per_row),
        transcendentals=0,
        bytes_accessed=int(b_pad * FD * itemsize + out_bytes + sel_bytes),
    )

    out = pl.pallas_call(
        kernel,
        out_shape=out_shape,
        grid=(num_tiles,),
        in_specs=in_specs,
        out_specs=out_specs,
        compiler_params=pltpu.CompilerParams(
            dimension_semantics=("parallel",),
            vmem_limit_bytes=vmem_limit,
        ),
        cost_estimate=cost,
    )(*operands)

    if reduce_sum:
        return out.reshape(b_pad, 1)[:B]
    return out[:B]


def _fm_reference(x, reduce_sum=True):
    xf = x.astype(jnp.float32)
    square_of_sum = jnp.sum(xf, axis=1) ** 2
    sum_of_square = jnp.sum(xf ** 2, axis=1)
    ix = square_of_sum - sum_of_square
    if reduce_sum:
        ix = jnp.sum(ix, axis=1, keepdims=True)
    return 0.5 * ix


if __name__ == "__main__":
    key = jax.random.PRNGKey(0)

    # --- Small fp32 case matching the module's convention ---------------------
    B, F, D = 2, 4, 32
    x = jax.random.normal(key, (B, F, D), dtype=jnp.float32)
    out = jax.block_until_ready(factorization_machine(x, reduce_sum=True))
    ref = _fm_reference(x, reduce_sum=True)
    assert out.shape == (B, 1), out.shape
    assert jnp.allclose(out, ref, atol=1e-3, rtol=1e-3)

    out_nr = jax.block_until_ready(factorization_machine(x, reduce_sum=False))
    ref_nr = _fm_reference(x, reduce_sum=False)
    assert out_nr.shape == (B, D)
    assert jnp.allclose(out_nr, ref_nr, atol=1e-3, rtol=1e-3)

    # --- Non-multiple-of-tile batch (padding, single tile) ---------------------
    k2 = jax.random.PRNGKey(1)
    B2, F2, D2 = 300, 4, 32
    x2 = jax.random.normal(k2, (B2, F2, D2), dtype=jnp.float32)
    out2 = jax.block_until_ready(factorization_machine(x2, reduce_sum=True))
    ref2 = _fm_reference(x2, reduce_sum=True)
    assert out2.shape == (B2, 1)
    assert jnp.allclose(out2, ref2, atol=1e-3, rtol=1e-3)

    # --- bf16 input: f32 accumulation inside the kernel ------------------------
    k3 = jax.random.PRNGKey(2)
    B3, F3, D3 = 64, 10, 16
    x3 = jax.random.normal(k3, (B3, F3, D3), dtype=jnp.bfloat16)
    out3 = jax.block_until_ready(factorization_machine(x3, reduce_sum=True))
    ref3 = _fm_reference(x3, reduce_sum=True)
    assert out3.shape == (B3, 1)
    assert jnp.allclose(out3.astype(jnp.float32), ref3, atol=5e-2, rtol=5e-2)

    # --- D multiple of 128: lane-aligned reshape path (no selection matmul) ----
    k4 = jax.random.PRNGKey(3)
    B4, F4, D4 = 16, 3, 128
    x4 = jax.random.normal(k4, (B4, F4, D4), dtype=jnp.float32)
    out4 = jax.block_until_ready(factorization_machine(x4, reduce_sum=True))
    ref4 = _fm_reference(x4, reduce_sum=True)
    assert out4.shape == (B4, 1)
    assert jnp.allclose(out4, ref4, atol=1e-3, rtol=1e-4)
    out4_nr = jax.block_until_ready(factorization_machine(x4, reduce_sum=False))
    assert jnp.allclose(out4_nr, _fm_reference(x4, reduce_sum=False),
                        atol=1e-3, rtol=1e-4)

    # --- Larger batch: exercises the >=2 grid steps split + multi-tile output --
    k5 = jax.random.PRNGKey(4)
    B5, F5, D5 = 3000, 4, 32
    x5 = jax.random.normal(k5, (B5, F5, D5), dtype=jnp.float32)
    out5 = jax.block_until_ready(factorization_machine(x5, reduce_sum=True))
    ref5 = _fm_reference(x5, reduce_sum=True)
    assert out5.shape == (B5, 1)
    assert jnp.allclose(out5, ref5, atol=1e-3, rtol=1e-3)

    print("KERNEL_OK")
</pallas_src>

<mosaic_0001>
module attributes {stable_mosaic.version = 11 : i64} {
  func.func @_fm_kernel_matmul(%arg0: i32, %arg1: memref<8x128xf32, #tpu.memory_space<vmem>>, %arg2: memref<128x32xf32, #tpu.memory_space<vmem>>, %arg3: memref<1x8xf32, #tpu.memory_space<vmem>>) attributes {dimension_semantics = [#tpu.dimension_semantics<parallel>], iteration_bounds = array<i64: 1>, scalar_prefetch = 0 : i64, scratch_operands = 0 : i64, tpu.core_type = #tpu.core_type<tc>, window_params = [{transform_indices = @transform_0, window_bounds = array<i64: 8, 128>}, {pipeline_mode = #tpu.pipeline_mode<synchronous>, transform_indices = @transform_1, window_bounds = array<i64: 128, 32>}, {transform_indices = @transform_2, window_bounds = array<i64: 1, 8>}]} {
    %c0 = arith.constant 0 : index
    %c0_0 = arith.constant 0 : index
    %0 = vector.load %arg1[%c0, %c0_0] : memref<8x128xf32, #tpu.memory_space<vmem>>, vector<8x128xf32>
    %c0_1 = arith.constant 0 : index
    %c0_2 = arith.constant 0 : index
    %1 = vector.load %arg2[%c0_1, %c0_2] : memref<128x32xf32, #tpu.memory_space<vmem>>, vector<128x32xf32>
    %cst = arith.constant dense<0.000000e+00> : vector<8x32xf32>
    %2 = tpu.matmul %0, %1, %cst {dimension_numbers = #tpu.dot_dimension_numbers<[1], [0], [0], [1], [0, 0, 1, 1], [], []>} : vector<8x128xf32>, vector<128x32xf32>, vector<8x32xf32> -> vector<8x32xf32>
    %3 = arith.mulf %2, %2 : vector<8x32xf32>
    %cst_3 = arith.constant dense<0.000000e+00> : vector<8xf32>
    %4 = vector.multi_reduction <add>, %3, %cst_3 [1] : vector<8x32xf32> to vector<8xf32>
    %5 = arith.mulf %0, %0 : vector<8x128xf32>
    %cst_4 = arith.constant dense<0.000000e+00> : vector<8xf32>
    %6 = vector.multi_reduction <add>, %5, %cst_4 [1] : vector<8x128xf32> to vector<8xf32>
    %7 = arith.subf %4, %6 : vector<8xf32>
    %cst_5 = arith.constant 5.000000e-01 : f32
    %8 = vector.broadcast %cst_5 : f32 to vector<8xf32>
    %9 = arith.mulf %8, %7 : vector<8xf32>
    %10 = vector.shape_cast %9 : vector<8xf32> to vector<1x8xf32>
    %c0_6 = arith.constant 0 : index
    %c0_7 = arith.constant 0 : index
    %11 = vector.load %arg3[%c0_6, %c0_7] : memref<1x8xf32, #tpu.memory_space<vmem>>, vector<1x8xf32>
    tpu.vector_store %arg3[%c0_6, %c0_7], %10 {strides = array<i32>} : memref<1x8xf32, #tpu.memory_space<vmem>>, vector<1x8xf32>,
    return
  }
  func.func @transform_0(%arg0: i32) -> (i32, i32) {
    %c0_i32 = arith.constant 0 : i32
    %c0_i32_0 = arith.constant 0 : i32
    return %arg0, %c0_i32 : i32, i32
  }
  func.func @transform_1(%arg0: i32) -> (i32, i32) {
    %c0_i32 = arith.constant 0 : i32
    %c0_i32_0 = arith.constant 0 : i32
    %c0_i32_1 = arith.constant 0 : i32
    return %c0_i32, %c0_i32_0 : i32, i32
  }
  func.func @transform_2(%arg0: i32) -> (i32, i32) {
    %c0_i32 = arith.constant 0 : i32
    %c0_i32_0 = arith.constant 0 : i32
    return %arg0, %c0_i32 : i32, i32
  }
}

</mosaic_0001>

<llo_original>
// kernel: tpu_custom_call.1
$region0: #{tpu_custom_call.1}
  #allocation0 [shape = 'u32[]', space=smem, size = 0x4, offset = 0x4, fixed_abs, tag = 'smem constant byte address 0x4 - core index']
  #allocation1 [shape = 'u32[144,128]{1,0:T(1,128)}', space=vmem, size = 0x12000, scoped, tag = 'internal scratch']
  %s0 = inlined_call_operand.vmem [shape: f32[8,128], index: 0, kind: input, shape index: {}]
  %s1 = inlined_call_operand.vmem [shape: f32[128,32], index: 1, kind: input, shape index: {}]
  %s2 = inlined_call_operand.hbm [shape: f32[1,8], index: 2, kind: output, shape index: {}]
  %s3 = sld [smem:[#allocation0]]
  $region18: #{tpu_custom_call.1} parent=0
    _
  %s5 = ssub.s32 1, %s3
  %s6 = scalar_select 0, %s5, %s3
  $region1: #{tpu_custom_call.1} parent=0
    #allocation2 [shape = 'u8[512]{0}', space=vmem, size = 0x400, scoped, tag = 'output window, operand 0, single buffered']
    #allocation3 [shape = 's32[1]{0}', space=sflag, size = 0x4, scoped, tag = 'scoped memory for tpu_custom_call.1']
    %7 = vsyncpa [#allocation3], 0
    // Predicated region
    $region2: #{tpu_custom_call.1} parent=1 // pred_check
      _
    $region3: #{tpu_custom_call.1} parent=1 // pred_check_branch
      %9 = sbr.rel (0) target = $region5
    $region4: #{tpu_custom_call.1} parent=1 // pred_region
      _
    $region5: #{tpu_custom_call.1} parent=1 // pred_fallthru
      _
    // Predicated region
    $region6: #{tpu_custom_call.1} parent=1 // pred_check
      _
    $region7: #{tpu_custom_call.1} parent=1 // pred_check_branch
      %11 = sbr.rel (0) target = $region9
    $region8: #{tpu_custom_call.1} parent=1 // pred_region
      _
    $region9: #{tpu_custom_call.1} parent=1 // pred_fallthru
      _
    %v12 = vld [vmem:[%s0] sm:$0xff]
    %v13 = vld [vmem:[%s1] sm:$0xff]
    %v14 = vld [vmem:[%s1 + $0x8] sm:$0xff]
    %v15 = vld [vmem:[%s1 + $0x10] sm:$0xff]
    %v16 = vld [vmem:[%s1 + $0x18] sm:$0xff]
    %v17 = vld [vmem:[%s1 + $0x20] sm:$0xff]
    %v18 = vld [vmem:[%s1 + $0x28] sm:$0xff]
    %v19 = vld [vmem:[%s1 + $0x30] sm:$0xff]
    %v20 = vld [vmem:[%s1 + $0x38] sm:$0xff]
    %v21 = vld [vmem:[%s1 + $0x40] sm:$0xff]
    %v22 = vld [vmem:[%s1 + $0x48] sm:$0xff]
    %v23 = vld [vmem:[%s1 + $0x50] sm:$0xff]
    %v24 = vld [vmem:[%s1 + $0x58] sm:$0xff]
    %v25 = vld [vmem:[%s1 + $0x60] sm:$0xff]
    %v26 = vld [vmem:[%s1 + $0x68] sm:$0xff]
    %v27 = vld [vmem:[%s1 + $0x70] sm:$0xff]
    %v28 = vld [vmem:[%s1 + $0x78] sm:$0xff]
    %29 = vmatprep.subr.mxu0 0.0
    %30 = vmatpush1.msra.mxu0 %v28
    %31 = vmatprep.subr.mxu0 0.0
    %32 = vmatpush1.msra.mxu0 %v27
    %33 = vmatprep.subr.mxu0 0.0
    %34 = vmatpush1.msra.mxu0 %v26
    %35 = vmatprep.subr.mxu0 0.0
    %36 = vmatpush1.msra.mxu0 %v25
    %37 = vmatprep.subr.mxu0 0.0
    %38 = vmatpush1.msra.mxu0 %v24
    %39 = vmatprep.subr.mxu0 0.0
    %40 = vmatpush1.msra.mxu0 %v23
    %41 = vmatprep.subr.mxu0 0.0
    %42 = vmatpush1.msra.mxu0 %v22
    %43 = vmatprep.subr.mxu0 0.0
    %44 = vmatpush1.msra.mxu0 %v21
    %45 = vmatprep.subr.mxu0 0.0
    %46 = vmatpush1.msra.mxu0 %v20
    %47 = vmatprep.subr.mxu0 0.0
    %48 = vmatpush1.msra.mxu0 %v19
    %49 = vmatprep.subr.mxu0 0.0
    %50 = vmatpush1.msra.mxu0 %v18
    %51 = vmatprep.subr.mxu0 0.0
    %52 = vmatpush1.msra.mxu0 %v17
    %53 = vmatprep.subr.mxu0 0.0
    %54 = vmatpush1.msra.mxu0 %v16
    %55 = vmatprep.subr.mxu0 0.0
    %56 = vmatpush1.msra.mxu0 %v15
    %57 = vmatprep.subr.mxu0 0.0
    %58 = vmatpush1.msra.mxu0 %v14
    %59 = vmatprep.subr.mxu0 0.0
    %60 = vmatpush1.msra.mxu0 %v13
    %61 = vmatprep.subr.mxu0 0.0
    %62 = vmatpush2.msra.mxu0 0.0
    %63 = vmatprep.subr.mxu0 0.0
    %64 = vmatpush2.msra.mxu0 0.0
    %65 = vmatprep.subr.mxu0 0.0
    %66 = vmatpush2.msra.mxu0 0.0
    %67 = vmatprep.subr.mxu0 0.0
    %68 = vmatpush2.msra.mxu0 0.0
    %69 = vmatprep.subr.mxu0 0.0
    %70 = vmatpush2.msra.mxu0 0.0
    %71 = vmatprep.subr.mxu0 0.0
    %72 = vmatpush2.msra.mxu0 0.0
    %73 = vmatprep.subr.mxu0 0.0
    %74 = vmatpush2.msra.mxu0 0.0
    %75 = vmatprep.subr.mxu0 0.0
    %76 = vmatpush2.msra.mxu0 0.0
    %77 = vmatprep.subr.mxu0 0.0
    %78 = vmatpush2.msra.mxu0 0.0
    %79 = vmatprep.subr.mxu0 0.0
    %80 = vmatpush2.msra.mxu0 0.0
    %81 = vmatprep.subr.mxu0 0.0
    %82 = vmatpush2.msra.mxu0 0.0
    %83 = vmatprep.subr.mxu0 0.0
    %84 = vmatpush2.msra.mxu0 0.0
    %85 = vmatprep.subr.mxu0 0.0
    %86 = vmatpush2.msra.mxu0 0.0
    %87 = vmatprep.subr.mxu0 0.0
    %88 = vmatpush2.msra.mxu0 0.0
    %89 = vmatprep.subr.mxu0 0.0
    %90 = vmatpush2.msra.mxu0 0.0
    %91 = vmatprep.subr.mxu0 0.0
    %92 = vmatpush2.msra.mxu0 0.0
    %93 = vmatprep.mubr.f32.mxu0 0.0
    %94 = vmatmul.mubr.f32.gmra.mxu0 %v12
    %v95 = vpop.f32.mrf.mxu0
    %v96 = vadd.f32 0.0, %v95
    %v97 = vpop.f32.mrf.mxu0
    %98 = vdwg.mxu0
    %v99 = vmul.f32 %v96, %v96
    %vm100 = vcmask 261120
    %v101 = vsel %vm100, %v99, 0.0
    %102 = vadd.xlane.f32.xlu0 %v101
    %v103 = vpop.xlane.xlu0 %102
    %v104 = vmul.f32 %v12, %v12
    %105 = vadd.xlane.f32.xlu0 %v104
    %v106 = vpop.xlane.xlu0 %105
    %v107 = vsub.f32 %v103, %v106
    %v108 = vmul.f32 %v107, 0.5
    %v110 = vlaneseq
    %v111 = vand.u32 %v110, 127
    %v112 = vlaneseq
    %v113 = vshrl.u32 %v112, 7
    %v114 = vsub.s32 %v111, %v113
    %v115 = vrot.slane %v108, %v114
    %vm117 = vcmask 57344
    %118 = vst.msk [vmem:[#allocation2] sm:$0x1] %vm117, %v115
    // Predicated region
    $region10: #{tpu_custom_call.1} parent=1 // pred_check
      _
    $region11: #{tpu_custom_call.1} parent=1 // pred_check_branch
      %120 = sbr.rel (0) target = $region13
    $region12: #{tpu_custom_call.1} parent=1 // pred_region
      %s122 = ssub.s32 16, 16
      %123 = vsyncadd [#allocation3], %s122
      %s125 = sshll.u32 [#allocation2], 4
      %s126 = int_to_ptr.vmem [resolvable:$true] %s125
      %128 = dma.vmem_to_hbm [thread:$0]  %s126, 16, %s2, [#allocation3]
    $region13: #{tpu_custom_call.1} parent=1 // pred_fallthru
      _
    // Predicated region
    $region14: #{tpu_custom_call.1} parent=1 // pred_check
      _
    $region15: #{tpu_custom_call.1} parent=1 // pred_check_branch
      %130 = sbr.rel (0) target = $region17
    $region16: #{tpu_custom_call.1} parent=1 // pred_region
      %131 = dma.done [#allocation3], 16
    $region17: #{tpu_custom_call.1} parent=1 // pred_fallthru
      _
    %132 = vsyncpa [#allocation3], 1

</llo_original>
